<compile_context>
chip_gen: v6e
topology: v6e:2x2x1
jax: 0.10.0
libtpu: 0.0.40
codegen_flags: <defaults>
</compile_context>

<pallas_src>
import math

import jax
import jax.numpy as jnp
from jax.experimental import pallas as pl
from jax.experimental.pallas import tpu as pltpu

_INV_SQRT2 = 1.0 / math.sqrt(2.0)


def _round_up(x, m):
    return ((x + m - 1) // m) * m


def _device_kind():
    try:
        return jax.devices()[0].device_kind.lower()
    except Exception:
        return ""


def _generation_targets():
    """Returns (tm_target, th_target, n_tensorcores, vmem_capacity_fallback)."""
    kind = _device_kind()
    if "v7" in kind:
        return 512, 512, 2, 64 << 20
    if "v6" in kind:
        return 1024, 1024, 1, 128 << 20
    if "v5" in kind:
        return 512, 2048, 1, 128 << 20
    return 512, 1024, 1, 64 << 20


def _vmem_capacity_bytes(fallback):
    try:
        return int(pltpu.get_tpu_info().vmem_capacity_bytes)
    except Exception:
        return fallback


def _plan_tiles(M, C, H, x_bytes, out_bytes, acc_in_out, tm_target, th_target, budget):
    """Pick (tm, th, footprint): tm a multiple of 16, th a multiple-of-128 divisor
    of H (or H itself), such that the double-buffered VMEM footprint fits budget."""

    def footprint(tm, th):
        fp = 2 * tm * C * x_bytes            # x tiles (input dtype, double-buffered)
        fp += 2 * C * th * 2                 # W1 chunks (bf16, double-buffered)
        fp += 2 * th * C * 2                 # W2 chunks (bf16, double-buffered)
        fp += 2 * th * 4 + 2 * C * 4         # bias chunks (f32)
        fp += 2 * tm * C * out_bytes         # output tiles (double-buffered)
        if not acc_in_out:
            fp += tm * C * 4                 # f32 accumulator scratch
        fp += tm * th * 6                    # GELU intermediate (f32 + bf16 copy)
        return fp

    def th_candidates(limit):
        if H <= 128 or H % 128 != 0:
            return [H]                       # take H whole (block == full dim is legal)
        top = (min(limit, H) // 128) * 128
        cands = [t for t in range(top, 127, -128) if H % t == 0]
        return cands if cands else [H]

    tm = min(tm_target, _round_up(M, 16))
    while True:
        for th in th_candidates(th_target):
            if footprint(tm, th) <= budget:
                return tm, th, footprint(tm, th)
        if tm > 128:
            tm = max(128, _round_up(tm // 2, 16))
        else:
            th = th_candidates(th_target)[-1]
            return tm, th, footprint(tm, th)   # best-effort smallest plan


def _gelu_f32(h):
    # exact GELU (erf form), matches torch.nn.GELU() default; computed in f32
    return 0.5 * h * (1.0 + jax.lax.erf(h * jnp.float32(_INV_SQRT2)))


def _mlp_kernel_acc_in_out(x_ref, w1_ref, b1_ref, w2_ref, b2_ref, o_ref):
    """f32 output: o_ref is the resident accumulator across the k (hidden) axis."""
    k = pl.program_id(1)

    @pl.when(k == 0)
    def _():
        o_ref[...] = jnp.zeros_like(o_ref)

    x = x_ref[...].astype(jnp.bfloat16)
    h = jnp.dot(x, w1_ref[...], preferred_element_type=jnp.float32)
    h = _gelu_f32(h + b1_ref[...])
    o_ref[...] += jnp.dot(h.astype(w2_ref.dtype), w2_ref[...],
                          preferred_element_type=jnp.float32)

    @pl.when(k == pl.num_programs(1) - 1)
    def _():
        # dropout: identity (eval mode)
        o_ref[...] += b2_ref[...]


def _mlp_kernel_scratch_acc(x_ref, w1_ref, b1_ref, w2_ref, b2_ref, o_ref, acc_ref):
    """Generic output dtype (e.g. bf16): f32 scratch accumulation, cast at finalize."""
    k = pl.program_id(1)

    @pl.when(k == 0)
    def _():
        acc_ref[...] = jnp.zeros_like(acc_ref)

    x = x_ref[...].astype(jnp.bfloat16)
    h = jnp.dot(x, w1_ref[...], preferred_element_type=jnp.float32)
    h = _gelu_f32(h + b1_ref[...])
    acc_ref[...] += jnp.dot(h.astype(w2_ref.dtype), w2_ref[...],
                            preferred_element_type=jnp.float32)

    @pl.when(k == pl.num_programs(1) - 1)
    def _():
        # dropout: identity (eval mode)
        o_ref[...] = (acc_ref[...] + b2_ref[...]).astype(o_ref.dtype)


def mlp_pallas(x, w1, b1, w2, b2, *, out_dtype=None):
    """x: (B, T, C). w1: (C, 4C), b1: (4C,), w2: (4C, C), b2: (C,).
    Weights are (in_features, out_features), i.e. transpose of nn.Linear.weight.
    Hold w1/w2 in bf16 at the caller to avoid a per-call cast pass."""
    B, T, C = x.shape
    H = w1.shape[1]
    M = B * T
    out_dtype = jnp.dtype(out_dtype or x.dtype)
    x_bytes = jnp.dtype(x.dtype).itemsize
    out_bytes = out_dtype.itemsize
    acc_in_out = out_dtype == jnp.dtype(jnp.float32)

    tm_target, th_target, n_cores, vmem_fallback = _generation_targets()
    vmem_cap = _vmem_capacity_bytes(vmem_fallback)
    budget = max(vmem_cap - (16 << 20), 8 << 20)   # ~16 MiB headroom for the compiler

    tm0 = min(tm_target, _round_up(M, 16))
    if n_cores >= 2 and M >= 2 * 256:
        # keep both TensorCores (v7x) busy on the "parallel" row axis
        tm0 = min(tm0, _round_up(-(-M // 2), 16))
    tm, th, fp = _plan_tiles(M, C, H, x_bytes, out_bytes, acc_in_out,
                             tm0, th_target, budget)

    M_pad = _round_up(M, tm)
    n_m, n_h = M_pad // tm, H // th

    x2d = x.reshape(M, C)
    if M_pad != M:
        x2d = jnp.pad(x2d, ((0, M_pad - M), (0, 0)))

    # bf16 matmul operands; a no-op if the caller already holds bf16 weights.
    w1_bf = w1.astype(jnp.bfloat16)
    w2_bf = w2.astype(jnp.bfloat16)
    b1_2d = b1.reshape(1, H).astype(jnp.float32)
    b2_2d = b2.reshape(1, C).astype(jnp.float32)

    vmem_limit = int(fp * 1.4) + (8 << 20)
    vmem_limit = max(vmem_limit, 32 << 20)
    vmem_limit = min(vmem_limit, vmem_cap - (4 << 20))

    cost = pl.CostEstimate(
        flops=4 * M_pad * C * H,                    # two matmuls
        transcendentals=M_pad * H,                  # erf in GELU
        bytes_accessed=int(M_pad * C * x_bytes      # x streamed once
                           + n_m * 2 * C * H * 2    # W1 + W2 re-streamed per row tile
                           + n_m * (H + C) * 4      # biases re-streamed per row tile
                           + M_pad * C * out_bytes),
    )

    if acc_in_out:
        kernel = _mlp_kernel_acc_in_out
        scratch_shapes = []
    else:
        kernel = _mlp_kernel_scratch_acc
        scratch_shapes = [pltpu.VMEM((tm, C), jnp.float32)]

    out2d = pl.pallas_call(
        kernel,
        out_shape=jax.ShapeDtypeStruct((M_pad, C), out_dtype),
        grid_spec=pltpu.PrefetchScalarGridSpec(
            num_scalar_prefetch=0,
            grid=(n_m, n_h),                                   # reduction axis (H) last
            in_specs=[
                pl.BlockSpec((tm, C), lambda i, k: (i, 0)),    # x row tile
                pl.BlockSpec((C, th), lambda i, k: (0, k)),    # W1 chunk
                pl.BlockSpec((1, th), lambda i, k: (0, k)),    # b1 chunk
                pl.BlockSpec((th, C), lambda i, k: (k, 0)),    # W2 chunk
                pl.BlockSpec((1, C), lambda i, k: (0, 0)),     # b2
            ],
            out_specs=pl.BlockSpec((tm, C), lambda i, k: (i, 0)),
            scratch_shapes=scratch_shapes,
        ),
        compiler_params=pltpu.CompilerParams(
            dimension_semantics=("parallel", "arbitrary"),
            vmem_limit_bytes=int(vmem_limit),
        ),
        cost_estimate=cost,
    )(x2d, w1_bf, b1_2d, w2_bf, b2_2d)

    if M_pad != M:
        out2d = out2d[:M]
    return out2d.reshape(B, T, C)


def mlp_reference(x, w1, b1, w2, b2):
    h = jnp.einsum("btc,ch->bth", x, w1) + b1
    h = jax.nn.gelu(h, approximate=False)
    return jnp.einsum("bth,hc->btc", h, w2) + b2


if __name__ == "__main__":
    # Small GPT-ish config with a lane-dense feature dim: batch=2, seq=8,
    # n_embd=128 (hidden = 4*n_embd = 512).
    B, T, C = 2, 8, 128
    H = 4 * C

    key = jax.random.PRNGKey(0)
    kx, k1, kb1, k2, kb2 = jax.random.split(key, 5)

    x = jax.random.normal(kx, (B, T, C), dtype=jnp.float32)
    # Deterministic init ~ PyTorch Linear default scale (uniform in +-1/sqrt(fan_in))
    w1 = jax.random.uniform(k1, (C, H), jnp.float32, -1.0 / math.sqrt(C), 1.0 / math.sqrt(C))
    b1 = jax.random.uniform(kb1, (H,), jnp.float32, -1.0 / math.sqrt(C), 1.0 / math.sqrt(C))
    w2 = jax.random.uniform(k2, (H, C), jnp.float32, -1.0 / math.sqrt(H), 1.0 / math.sqrt(H))
    b2 = jax.random.uniform(kb2, (C,), jnp.float32, -1.0 / math.sqrt(H), 1.0 / math.sqrt(H))

    # Cast weights to bf16 once at the caller (hot path never re-casts them).
    w1_bf = w1.astype(jnp.bfloat16)
    w2_bf = w2.astype(jnp.bfloat16)

    out = jax.block_until_ready(mlp_pallas(x, w1_bf, b1, w2_bf, b2))
    ref = mlp_reference(x, w1, b1, w2, b2)

    assert out.shape == (B, T, C)
    assert out.dtype == x.dtype
    # bf16 matmul operands -> looser tolerance vs the f32 reference
    max_err = float(jnp.max(jnp.abs(out - ref)))
    assert jnp.allclose(out, ref, atol=3e-2, rtol=3e-2), f"mismatch, max_err={max_err}"

    print("KERNEL_OK")
</pallas_src>

<mosaic_0001>
module attributes {stable_mosaic.version = 11 : i64} {
  func.func @_mlp_kernel_acc_in_out(%arg0: i32, %arg1: i32, %arg2: memref<16x128xf32, #tpu.memory_space<vmem>>, %arg3: memref<128x512xbf16, #tpu.memory_space<vmem>>, %arg4: memref<1x512xf32, #tpu.memory_space<vmem>>, %arg5: memref<512x128xbf16, #tpu.memory_space<vmem>>, %arg6: memref<1x128xf32, #tpu.memory_space<vmem>>, %arg7: memref<16x128xf32, #tpu.memory_space<vmem>>) attributes {dimension_semantics = [#tpu.dimension_semantics<parallel>, #tpu.dimension_semantics<arbitrary>], iteration_bounds = array<i64: 1, 1>, scalar_prefetch = 0 : i64, scratch_operands = 0 : i64, tpu.core_type = #tpu.core_type<tc>, window_params = [{transform_indices = @transform_0, window_bounds = array<i64: 16, 128>}, {transform_indices = @transform_1, window_bounds = array<i64: 128, 512>}, {transform_indices = @transform_2, window_bounds = array<i64: 1, 512>}, {transform_indices = @transform_3, window_bounds = array<i64: 512, 128>}, {pipeline_mode = #tpu.pipeline_mode<synchronous>, transform_indices = @transform_4, window_bounds = array<i64: 1, 128>}, {transform_indices = @transform_5, window_bounds = array<i64: 16, 128>}]} {
    %c0_i32 = arith.constant 0 : i32
    %0 = arith.cmpi eq, %arg1, %c0_i32 : i32
    %1 = arith.extui %0 : i1 to i32
    %c0_i32_0 = arith.constant 0 : i32
    %2 = arith.cmpi ne, %1, %c0_i32_0 : i32
    scf.if %2 {
      %cst_18 = arith.constant 0.000000e+00 : f32
      %27 = vector.broadcast %cst_18 : f32 to vector<16x128xf32>
      %c0_19 = arith.constant 0 : index
      %c0_20 = arith.constant 0 : index
      %28 = vector.load %arg7[%c0_19, %c0_20] : memref<16x128xf32, #tpu.memory_space<vmem>>, vector<16x128xf32>
      tpu.vector_store %arg7[%c0_19, %c0_20], %27 {strides = array<i32>} : memref<16x128xf32, #tpu.memory_space<vmem>>, vector<16x128xf32>,
    } else {
    }
    %c0 = arith.constant 0 : index
    %c0_1 = arith.constant 0 : index
    %3 = vector.load %arg2[%c0, %c0_1] : memref<16x128xf32, #tpu.memory_space<vmem>>, vector<16x128xf32>
    %4 = arith.truncf %3 : vector<16x128xf32> to vector<16x128xbf16>
    %c0_2 = arith.constant 0 : index
    %c0_3 = arith.constant 0 : index
    %5 = vector.load %arg3[%c0_2, %c0_3] : memref<128x512xbf16, #tpu.memory_space<vmem>>, vector<128x512xbf16>
    %cst = arith.constant dense<0.000000e+00> : vector<16x512xf32>
    %6 = tpu.matmul %4, %5, %cst {dimension_numbers = #tpu.dot_dimension_numbers<[1], [0], [0], [1], [0, 0, 1, 1], [], []>} : vector<16x128xbf16>, vector<128x512xbf16>, vector<16x512xf32> -> vector<16x512xf32>
    %c0_4 = arith.constant 0 : index
    %c0_5 = arith.constant 0 : index
    %7 = vector.load %arg4[%c0_4, %c0_5] : memref<1x512xf32, #tpu.memory_space<vmem>>, vector<1x512xf32>
    %8 = vector.broadcast %7 : vector<1x512xf32> to vector<16x512xf32>
    %9 = arith.addf %6, %8 : vector<16x512xf32>
    %cst_6 = arith.constant 5.000000e-01 : f32
    %10 = vector.broadcast %cst_6 : f32 to vector<16x512xf32>
    %11 = arith.mulf %10, %9 : vector<16x512xf32>
    %cst_7 = arith.constant 0.707106769 : f32
    %12 = vector.broadcast %cst_7 : f32 to vector<16x512xf32>
    %13 = arith.mulf %9, %12 : vector<16x512xf32>
    %14 = math.erf %13 : vector<16x512xf32>
    %cst_8 = arith.constant 1.000000e+00 : f32
    %15 = vector.broadcast %cst_8 : f32 to vector<16x512xf32>
    %16 = arith.addf %15, %14 : vector<16x512xf32>
    %17 = arith.mulf %11, %16 : vector<16x512xf32>
    %c0_9 = arith.constant 0 : index
    %c0_10 = arith.constant 0 : index
    %18 = vector.load %arg7[%c0_9, %c0_10] : memref<16x128xf32, #tpu.memory_space<vmem>>, vector<16x128xf32>
    %19 = arith.truncf %17 : vector<16x512xf32> to vector<16x512xbf16>
    %c0_11 = arith.constant 0 : index
    %c0_12 = arith.constant 0 : index
    %20 = vector.load %arg5[%c0_11, %c0_12] : memref<512x128xbf16, #tpu.memory_space<vmem>>, vector<512x128xbf16>
    %cst_13 = arith.constant dense<0.000000e+00> : vector<16x128xf32>
    %21 = tpu.matmul %19, %20, %cst_13 {dimension_numbers = #tpu.dot_dimension_numbers<[1], [0], [0], [1], [0, 0, 1, 1], [], []>} : vector<16x512xbf16>, vector<512x128xbf16>, vector<16x128xf32> -> vector<16x128xf32>
    %22 = arith.addf %18, %21 : vector<16x128xf32>
    %c0_14 = arith.constant 0 : index
    %c0_15 = arith.constant 0 : index
    %23 = vector.load %arg7[%c0_14, %c0_15] : memref<16x128xf32, #tpu.memory_space<vmem>>, vector<16x128xf32>
    tpu.vector_store %arg7[%c0_14, %c0_15], %22 {strides = array<i32>} : memref<16x128xf32, #tpu.memory_space<vmem>>, vector<16x128xf32>,
    %c0_i32_16 = arith.constant 0 : i32
    %24 = arith.cmpi eq, %arg1, %c0_i32_16 : i32
    %25 = arith.extui %24 : i1 to i32
    %c0_i32_17 = arith.constant 0 : i32
    %26 = arith.cmpi ne, %25, %c0_i32_17 : i32
    scf.if %26 {
      %c0_18 = arith.constant 0 : index
      %c0_19 = arith.constant 0 : index
      %27 = vector.load %arg7[%c0_18, %c0_19] : memref<16x128xf32, #tpu.memory_space<vmem>>, vector<16x128xf32>
      %c0_20 = arith.constant 0 : index
      %c0_21 = arith.constant 0 : index
      %28 = vector.load %arg6[%c0_20, %c0_21] : memref<1x128xf32, #tpu.memory_space<vmem>>, vector<1x128xf32>
      %29 = vector.broadcast %28 : vector<1x128xf32> to vector<16x128xf32>
      %30 = arith.addf %27, %29 : vector<16x128xf32>
      %c0_22 = arith.constant 0 : index
      %c0_23 = arith.constant 0 : index
      %31 = vector.load %arg7[%c0_22, %c0_23] : memref<16x128xf32, #tpu.memory_space<vmem>>, vector<16x128xf32>
      tpu.vector_store %arg7[%c0_22, %c0_23], %30 {strides = array<i32>} : memref<16x128xf32, #tpu.memory_space<vmem>>, vector<16x128xf32>,
    } else {
    }
    return
  }
  func.func @transform_0(%arg0: i32, %arg1: i32) -> (i32, i32) {
    %c0_i32 = arith.constant 0 : i32
    %c0_i32_0 = arith.constant 0 : i32
    return %arg0, %c0_i32 : i32, i32
  }
  func.func @transform_1(%arg0: i32, %arg1: i32) -> (i32, i32) {
    %c0_i32 = arith.constant 0 : i32
    %c0_i32_0 = arith.constant 0 : i32
    return %c0_i32, %arg1 : i32, i32
  }
  func.func @transform_2(%arg0: i32, %arg1: i32) -> (i32, i32) {
    %c0_i32 = arith.constant 0 : i32
    %c0_i32_0 = arith.constant 0 : i32
    return %c0_i32, %arg1 : i32, i32
  }
  func.func @transform_3(%arg0: i32, %arg1: i32) -> (i32, i32) {
    %c0_i32 = arith.constant 0 : i32
    %c0_i32_0 = arith.constant 0 : i32
    return %arg1, %c0_i32 : i32, i32
  }
  func.func @transform_4(%arg0: i32, %arg1: i32) -> (i32, i32) {
    %c0_i32 = arith.constant 0 : i32
    %c0_i32_0 = arith.constant 0 : i32
    %c0_i32_1 = arith.constant 0 : i32
    return %c0_i32, %c0_i32_0 : i32, i32
  }
  func.func @transform_5(%arg0: i32, %arg1: i32) -> (i32, i32) {
    %c0_i32 = arith.constant 0 : i32
    %c0_i32_0 = arith.constant 0 : i32
    return %arg0, %c0_i32 : i32, i32
  }
}

</mosaic_0001>

<llo_original>
// kernel: tpu_custom_call.1
$region0: #{tpu_custom_call.1}
  #allocation0 [shape = 'u32[]', space=smem, size = 0x4, offset = 0x4, fixed_abs, tag = 'smem constant byte address 0x4 - core index']
  #allocation1 [shape = 'u32[144,128]{1,0:T(1,128)}', space=vmem, size = 0x12000, scoped, tag = 'internal scratch']
  %s0 = inlined_call_operand.hbm [shape: f32[16,128], index: 0, kind: input, shape index: {}]
  %s1 = inlined_call_operand.hbm [shape: bf16[128,512], index: 1, kind: input, shape index: {}]
  %s2 = inlined_call_operand.hbm [shape: f32[1,512], index: 2, kind: input, shape index: {}]
  %s3 = inlined_call_operand.hbm [shape: bf16[512,128], index: 3, kind: input, shape index: {}]
  %s4 = inlined_call_operand.vmem [shape: f32[1,128], index: 4, kind: input, shape index: {}]
  %s5 = inlined_call_operand.hbm [shape: f32[16,128], index: 5, kind: output, shape index: {}]
  %s6 = sld [smem:[#allocation0]]
  $region54: #{tpu_custom_call.1} parent=0
    _
  %s8 = ssub.s32 1, %s6
  %s9 = scalar_select 0, %s8, %s6
  $region1: #{tpu_custom_call.1} parent=0
    #allocation2 [shape = 'u8[8192]{0}', space=vmem, size = 0x2000, scoped, tag = 'input window, operand 0, single buffered']
    #allocation3 [shape = 's32[1]{0}', space=sflag, size = 0x4, scoped, tag = 'scoped memory for tpu_custom_call.1']
    #allocation4 [shape = 's32[1]{0}', space=sflag, size = 0x4, scoped, tag = 'scoped memory for tpu_custom_call.1']
    #allocation5 [shape = 'u8[131072]{0}', space=vmem, size = 0x20000, scoped, tag = 'input window, operand 1, single buffered']
    #allocation6 [shape = 's32[1]{0}', space=sflag, size = 0x4, scoped, tag = 'scoped memory for tpu_custom_call.1']
    #allocation7 [shape = 'u8[2048]{0}', space=vmem, size = 0x800, scoped, tag = 'input window, operand 2, single buffered']
    #allocation8 [shape = 'u8[131072]{0}', space=vmem, size = 0x20000, scoped, tag = 'input window, operand 3, single buffered']
    #allocation9 [shape = 's32[1]{0}', space=sflag, size = 0x4, scoped, tag = 'scoped memory for tpu_custom_call.1']
    #allocation10 [shape = 'u8[8192]{0}', space=vmem, size = 0x2000, scoped, tag = 'output window, operand 0, single buffered']
    %10 = vsyncpa [#allocation3], 0
    %11 = vsyncpa [#allocation6], 0
    %12 = vsyncpa [#allocation9], 0
    %13 = vsyncpa [#allocation4], 0
    // Predicated region
    $region2: #{tpu_custom_call.1} parent=1 // pred_check
      _
    $region3: #{tpu_custom_call.1} parent=1 // pred_check_branch
      %15 = sbr.rel (0) target = $region5
    $region4: #{tpu_custom_call.1} parent=1 // pred_region
      %s17 = ssub.s32 256, 256
      %18 = vsyncadd [#allocation3], %s17
      %s19 = sshll.u32 [#allocation2], 4
      %s20 = int_to_ptr.vmem [resolvable:$true] %s19
      %25 = dma.hbm_to_vmem [thread:$0]  %s0, 256, %s20, [#allocation3], 128, 128, 8
    $region5: #{tpu_custom_call.1} parent=1 // pred_fallthru
      _
    // Predicated region
    $region6: #{tpu_custom_call.1} parent=1 // pred_check
      _
    $region7: #{tpu_custom_call.1} parent=1 // pred_check_branch
      %27 = sbr.rel (0) target = $region9
    $region8: #{tpu_custom_call.1} parent=1 // pred_region
      %s29 = ssub.s32 4096, 4096
      %30 = vsyncadd [#allocation6], %s29
      %s31 = sshll.u32 [#allocation5], 4
      %s32 = int_to_ptr.vmem [resolvable:$true] %s31
      %37 = dma.hbm_to_vmem [thread:$0]  %s1, 4096, %s32, [#allocation6], 256, 256, 16
    $region9: #{tpu_custom_call.1} parent=1 // pred_fallthru
      _
    // Predicated region
    $region10: #{tpu_custom_call.1} parent=1 // pred_check
      _
    $region11: #{tpu_custom_call.1} parent=1 // pred_check_branch
      %39 = sbr.rel (0) target = $region13
    $region12: #{tpu_custom_call.1} parent=1 // pred_region
      %s41 = ssub.s32 64, 64
      %42 = vsyncadd [#allocation6], %s41
      %s44 = sshll.u32 [#allocation7], 4
      %s45 = int_to_ptr.vmem [resolvable:$true] %s44
      %47 = dma.hbm_to_vmem [thread:$0]  %s2, 64, %s45, [#allocation6]
    $region13: #{tpu_custom_call.1} parent=1 // pred_fallthru
      _
    // Predicated region
    $region14: #{tpu_custom_call.1} parent=1 // pred_check
      _
    $region15: #{tpu_custom_call.1} parent=1 // pred_check_branch
      %49 = sbr.rel (0) target = $region17
    $region16: #{tpu_custom_call.1} parent=1 // pred_region
      %s51 = ssub.s32 4096, 4096
      %52 = vsyncadd [#allocation9], %s51
      %s53 = sshll.u32 [#allocation8], 4
      %s54 = int_to_ptr.vmem [resolvable:$true] %s53
      %59 = dma.hbm_to_vmem [thread:$0]  %s3, 4096, %s54, [#allocation9], 64, 64, 4
    $region17: #{tpu_custom_call.1} parent=1 // pred_fallthru
      _
    // Predicated region
    $region18: #{tpu_custom_call.1} parent=1 // pred_check
      _
    $region19: #{tpu_custom_call.1} parent=1 // pred_check_branch
      %61 = sbr.rel (0) target = $region21
    $region20: #{tpu_custom_call.1} parent=1 // pred_region
      _
    $region21: #{tpu_custom_call.1} parent=1 // pred_fallthru
      _
    // Predicated region
    $region22: #{tpu_custom_call.1} parent=1 // pred_check
      _
    $region23: #{tpu_custom_call.1} parent=1 // pred_check_branch
      %63 = sbr.rel (0) target = $region25
    $region24: #{tpu_custom_call.1} parent=1 // pred_region
      %64 = dma.done [#allocation3], 256
    $region25: #{tpu_custom_call.1} parent=1 // pred_fallthru
      _
    // Predicated region
    $region26: #{tpu_custom_call.1} parent=1 // pred_check
      _
    $region27: #{tpu_custom_call.1} parent=1 // pred_check_branch
      %66 = sbr.rel (0) target = $region29
    $region28: #{tpu_custom_call.1} parent=1 // pred_region
      %67 = dma.done [#allocation6], 4096
    $region29: #{tpu_custom_call.1} parent=1 // pred_fallthru
      _
    // Predicated region
    $region30: #{tpu_custom_call.1} parent=1 // pred_check
      _
    $region31: #{tpu_custom_call.1} parent=1 // pred_check_branch
      %69 = sbr.rel (0) target = $region33
    $region32: #{tpu_custom_call.1} parent=1 // pred_region
      %70 = dma.done [#allocation6], 64
    $region33: #{tpu_custom_call.1} parent=1 // pred_fallthru
      _
    // Predicated region
    $region34: #{tpu_custom_call.1} parent=1 // pred_check
      _
    $region35: #{tpu_custom_call.1} parent=1 // pred_check_branch
      %72 = sbr.rel (0) target = $region37
    $region36: #{tpu_custom_call.1} parent=1 // pred_region
      %73 = dma.done [#allocation9], 4096
    $region37: #{tpu_custom_call.1} parent=1 // pred_fallthru
      _
    %p75 = scmp.eq.s32.totalorder 0, 0
    // Predicated region
    $region38: #{tpu_custom_call.1} parent=1 // pred_check
      %p76 = pneg %p75
    $region39: #{tpu_custom_call.1} parent=1 // pred_check_branch
      %78 = sbr.rel (%p76) target = $region41
    $region40: #{tpu_custom_call.1} parent=1 // pred_region
      %79 = vst [vmem:[#allocation10] sm:$0xff] 0.0
      %80 = vst [vmem:[#allocation10 + $0x8] sm:$0xff] 0.0
    $region41: #{tpu_custom_call.1} parent=1 // pred_fallthru
      _
    %v81 = vld [vmem:[#allocation2] sm:$0xff]
    %v82 = vld [vmem:[#allocation2 + $0x8] sm:$0xff]
    %v83 = vpack.c.bf16 %v82, %v81
    %v84 = vld [vmem:[#allocation5] sm:$0xff]
    %v85 = vld [vmem:[#allocation5 + $0x8] sm:$0xff]
    %v86 = vld [vmem:[#allocation5 + $0x10] sm:$0xff]
    %v87 = vld [vmem:[#allocation5 + $0x18] sm:$0xff]
    %v88 = vld [vmem:[#allocation5 + $0x20] sm:$0xff]
    %v89 = vld [vmem:[#allocation5 + $0x28] sm:$0xff]
    %v90 = vld [vmem:[#allocation5 + $0x30] sm:$0xff]
    %v91 = vld [vmem:[#allocation5 + $0x38] sm:$0xff]
    %v92 = vld [vmem:[#allocation5 + $0x40] sm:$0xff]
    %v93 = vld [vmem:[#allocation5 + $0x48] sm:$0xff]
    %v94 = vld [vmem:[#allocation5 + $0x50] sm:$0xff]
    %v95 = vld [vmem:[#allocation5 + $0x58] sm:$0xff]
    %v96 = vld [vmem:[#allocation5 + $0x60] sm:$0xff]
    %v97 = vld [vmem:[#allocation5 + $0x68] sm:$0xff]
    %v98 = vld [vmem:[#allocation5 + $0x70] sm:$0xff]
    %v99 = vld [vmem:[#allocation5 + $0x78] sm:$0xff]
    %v100 = vld [vmem:[#allocation5 + $0x80] sm:$0xff]
    %v101 = vld [vmem:[#allocation5 + $0x88] sm:$0xff]
    %v102 = vld [vmem:[#allocation5 + $0x90] sm:$0xff]
    %v103 = vld [vmem:[#allocation5 + $0x98] sm:$0xff]
    %v104 = vld [vmem:[#allocation5 + $0xa0] sm:$0xff]
    %v105 = vld [vmem:[#allocation5 + $0xa8] sm:$0xff]
    %v106 = vld [vmem:[#allocation5 + $0xb0] sm:$0xff]
    %v107 = vld [vmem:[#allocation5 + $0xb8] sm:$0xff]
    %v108 = vld [vmem:[#allocation5 + $0xc0] sm:$0xff]
    %v109 = vld [vmem:[#allocation5 + $0xc8] sm:$0xff]
    %v110 = vld [vmem:[#allocation5 + $0xd0] sm:$0xff]
    %v111 = vld [vmem:[#allocation5 + $0xd8] sm:$0xff]
    %v112 = vld [vmem:[#allocation5 + $0xe0] sm:$0xff]
    %v113 = vld [vmem:[#allocation5 + $0xe8] sm:$0xff]
    %v114 = vld [vmem:[#allocation5 + $0xf0] sm:$0xff]
    %v115 = vld [vmem:[#allocation5 + $0xf8] sm:$0xff]
    %v116 = vld [vmem:[#allocation7] sm:$0xf]
    %v118 = vlaneseq
    %v119 = vshrl.u32 %v118, 7
    %v120 = vsub.s32 0, %v119
    %v121 = vrot.slane %v116, %v120
    %v122 = vlaneseq
    %v123 = vshrl.u32 %v122, 7
    %v124 = vsub.s32 1, %v123
    %v125 = vrot.slane %v116, %v124
    %v126 = vlaneseq
    %v127 = vshrl.u32 %v126, 7
    %v128 = vsub.s32 2, %v127
    %v129 = vrot.slane %v116, %v128
    %v130 = vlaneseq
    %v131 = vshrl.u32 %v130, 7
    %v132 = vsub.s32 3, %v131
    %v133 = vrot.slane %v116, %v132
    %v170 = vunpack.c.l.b16 %v84
    %v171 = vunpack.c.h.b16 %v84
    %v172 = vunpack.c.l.b16 %v85
    %v173 = vunpack.c.h.b16 %v85
    %v174 = vunpack.c.l.b16 %v86
    %v175 = vunpack.c.h.b16 %v86
    %v176 = vunpack.c.l.b16 %v87
    %v177 = vunpack.c.h.b16 %v87
    %v178 = vunpack.c.l.b16 %v88
    %v179 = vunpack.c.h.b16 %v88
    %v180 = vunpack.c.l.b16 %v89
    %v181 = vunpack.c.h.b16 %v89
    %v182 = vunpack.c.l.b16 %v90
    %v183 = vunpack.c.h.b16 %v90
    %v184 = vunpack.c.l.b16 %v91
    %v185 = vunpack.c.h.b16 %v91
    %v186 = vunpack.c.l.b16 %v92
    %v187 = vunpack.c.h.b16 %v92
    %v188 = vunpack.c.l.b16 %v93
    %v189 = vunpack.c.h.b16 %v93
    %v190 = vunpack.c.l.b16 %v94
    %v191 = vunpack.c.h.b16 %v94
    %v192 = vunpack.c.l.b16 %v95
    %v193 = vunpack.c.h.b16 %v95
    %v194 = vunpack.c.l.b16 %v96
    %v195 = vunpack.c.h.b16 %v96
    %v196 = vunpack.c.l.b16 %v97
    %v197 = vunpack.c.h.b16 %v97
    %v198 = vunpack.c.l.b16 %v98
    %v199 = vunpack.c.h.b16 %v98
    %v200 = vunpack.c.l.b16 %v99
    %v201 = vunpack.c.h.b16 %v99
    %v202 = vunpack.c.l.b16 %v100
    %v203 = vunpack.c.h.b16 %v100
    %v204 = vunpack.c.l.b16 %v101
    %v205 = vunpack.c.h.b16 %v101
    %v206 = vunpack.c.l.b16 %v102
    %v207 = vunpack.c.h.b16 %v102
    %v208 = vunpack.c.l.b16 %v103
    %v209 = vunpack.c.h.b16 %v103
    %v210 = vunpack.c.l.b16 %v104
    %v211 = vunpack.c.h.b16 %v104
    %v212 = vunpack.c.l.b16 %v105
    %v213 = vunpack.c.h.b16 %v105
    %v214 = vunpack.c.l.b16 %v106
    %v215 = vunpack.c.h.b16 %v106
    %v216 = vunpack.c.l.b16 %v107
    %v217 = vunpack.c.h.b16 %v107
    %v218 = vunpack.c.l.b16 %v108
    %v219 = vunpack.c.h.b16 %v108
    %v220 = vunpack.c.l.b16 %v109
    %v221 = vunpack.c.h.b16 %v109
    %v222 = vunpack.c.l.b16 %v110
    %v223 = vunpack.c.h.b16 %v110
    %v224 = vunpack.c.l.b16 %v111
    %v225 = vunpack.c.h.b16 %v111
    %v226 = vunpack.c.l.b16 %v112
    %v227 = vunpack.c.h.b16 %v112
    %v228 = vunpack.c.l.b16 %v113
    %v229 = vunpack.c.h.b16 %v113
    %v230 = vunpack.c.l.b16 %v114
    %v231 = vunpack.c.h.b16 %v114
    %v232 = vunpack.c.l.b16 %v115
    %v233 = vunpack.c.h.b16 %v115
    %v234 = vpack.c.b16 %v174, %v170
    %v235 = vpack.c.b16 %v175, %v171
    %v236 = vpack.c.b16 %v176, %v172
    %v237 = vpack.c.b16 %v177, %v173
    %v238 = vpack.c.b16 %v182, %v178
    %v239 = vpack.c.b16 %v183, %v179
    %v240 = vpack.c.b16 %v184, %v180
    %v241 = vpack.c.b16 %v185, %v181
    %v242 = vpack.c.b16 %v190, %v186
    %v243 = vpack.c.b16 %v191, %v187
    %v244 = vpack.c.b16 %v192, %v188
    %v245 = vpack.c.b16 %v193, %v189
    %v246 = vpack.c.b16 %v198, %v194
    %v247 = vpack.c.b16 %v199, %v195
    %v248 = vpack.c.b16 %v200, %v196
    %v249 = vpack.c.b16 %v201, %v197
    %v250 = vpack.c.b16 %v206, %v202
    %v251 = vpack.c.b16 %v207, %v203
    %v252 = vpack.c.b16 %v208, %v204
    %v253 = vpack.c.b16 %v209, %v205
    %v254 = vpack.c.b16 %v214, %v210
    %v255 = vpack.c.b16 %v215, %v211
    %v256 = vpack.c.b16 %v216, %v212
    %v257 = vpack.c.b16 %v217, %v213
    %v258 = vpack.c.b16 %v222, %v218
    %v259 = vpack.c.b16 %v223, %v219
    %v260 = vpack.c.b16 %v224, %v220
    %v261 = vpack.c.b16 %v225, %v221
    %v262 = vpack.c.b16 %v230, %v226
    %v263 = vpack.c.b16 %v231, %v227
    %v264 = vpack.c.b16 %v232, %v228
    %v265 = vpack.c.b16 %v233, %v229
    %298 = vmatprep.subr.bf16.mxu0 %v263
    %299 = vmatpush1.bf16.msra.mxu0 %v262
    %300 = vmatprep.subr.bf16.mxu0 %v259
    %301 = vmatpush1.bf16.msra.mxu0 %v258
    %302 = vmatprep.subr.bf16.mxu0 %v255
    %303 = vmatpush1.bf16.msra.mxu0 %v254
    %304 = vmatprep.subr.bf16.mxu0 %v251
    %305 = vmatpush1.bf16.msra.mxu0 %v250
    %306 = vmatprep.subr.bf16.mxu0 %v247
    %307 = vmatpush1.bf16.msra.mxu0 %v246
    %308 = vmatprep.subr.bf16.mxu0 %v243
    %309 = vmatpush1.bf16.msra.mxu0 %v242
    %310 = vmatprep.subr.bf16.mxu0 %v239
    %311 = vmatpush1.bf16.msra.mxu0 %v238
    %312 = vmatprep.subr.bf16.mxu0 %v235
    %313 = vmatpush1.bf16.msra.mxu0 %v234
    %314 = vmatprep.subr.bf16.mxu0 0
    %315 = vmatpush2.bf16.msra.mxu0 0
    %316 = vmatprep.subr.bf16.mxu0 0
    %317 = vmatpush2.bf16.msra.mxu0 0
    %318 = vmatprep.subr.bf16.mxu0 0
    %319 = vmatpush2.bf16.msra.mxu0 0
    %320 = vmatprep.subr.bf16.mxu0 0
    %321 = vmatpush2.bf16.msra.mxu0 0
    %322 = vmatprep.subr.bf16.mxu0 0
    %323 = vmatpush2.bf16.msra.mxu0 0
    %324 = vmatprep.subr.bf16.mxu0 0
    %325 = vmatpush2.bf16.msra.mxu0 0
    %326 = vmatprep.subr.bf16.mxu0 0
    %327 = vmatpush2.bf16.msra.mxu0 0
    %328 = vmatprep.subr.bf16.mxu0 0
    %329 = vmatpush2.bf16.msra.mxu0 0
    %330 = vmatprep.mubr.bf16.mxu0 0
    %331 = vmatmul.mubr.bf16.gmra.mxu0 %v83
    %v332 = vpop.f32.mrf.mxu0
    %v333 = vadd.f32 %v121, %v332
    %v334 = vpop.f32.mrf.mxu0
    %v335 = vadd.f32 %v125, %v334
    %v336 = vpop.f32.mrf.mxu0
    %v337 = vadd.f32 %v121, %v336
    %v338 = vpop.f32.mrf.mxu0
    %v339 = vadd.f32 %v125, %v338
    %340 = vdwg.mxu0
    %341 = vmatprep.subr.bf16.mxu0 %v265
    %342 = vmatpush1.bf16.msra.mxu0 %v264
    %343 = vmatprep.subr.bf16.mxu0 %v261
    %344 = vmatpush1.bf16.msra.mxu0 %v260
    %345 = vmatprep.subr.bf16.mxu0 %v257
    %346 = vmatpush1.bf16.msra.mxu0 %v256
    %347 = vmatprep.subr.bf16.mxu0 %v253
    %348 = vmatpush1.bf16.msra.mxu0 %v252
    %349 = vmatprep.subr.bf16.mxu0 %v249
    %350 = vmatpush1.bf16.msra.mxu0 %v248
    %351 = vmatprep.subr.bf16.mxu0 %v245
    %352 = vmatpush1.bf16.msra.mxu0 %v244
    %353 = vmatprep.subr.bf16.mxu0 %v241
    %354 = vmatpush1.bf16.msra.mxu0 %v240
    %355 = vmatprep.subr.bf16.mxu0 %v237
    %356 = vmatpush1.bf16.msra.mxu0 %v236
    %357 = vmatprep.subr.bf16.mxu0 0
    %358 = vmatpush2.bf16.msra.mxu0 0
    %359 = vmatprep.subr.bf16.mxu0 0
    %360 = vmatpush2.bf16.msra.mxu0 0
    %361 = vmatprep.subr.bf16.mxu0 0
    %362 = vmatpush2.bf16.msra.mxu0 0
    %363 = vmatprep.subr.bf16.mxu0 0
    %364 = vmatpush2.bf16.msra.mxu0 0
    %365 = vmatprep.subr.bf16.mxu0 0
    %366 = vmatpush2.bf16.msra.mxu0 0
    %367 = vmatprep.subr.bf16.mxu0 0
    %368 = vmatpush2.bf16.msra.mxu0 0
    %369 = vmatprep.subr.bf16.mxu0 0
    %370 = vmatpush2.bf16.msra.mxu0 0
    %371 = vmatprep.subr.bf16.mxu0 0
    %372 = vmatpush2.bf16.msra.mxu0 0
    %373 = vmatprep.mubr.bf16.mxu0 0
    %374 = vmatmul.mubr.bf16.gmra.mxu0 %v83
    %v375 = vpop.f32.mrf.mxu0
    %v376 = vadd.f32 %v129, %v375
    %v377 = vpop.f32.mrf.mxu0
    %v378 = vadd.f32 %v133, %v377
    %v379 = vpop.f32.mrf.mxu0
    %v380 = vadd.f32 %v129, %v379
    %v381 = vpop.f32.mrf.mxu0
    %v382 = vadd.f32 %v133, %v381
    %383 = vdwg.mxu0
    %v384 = vmul.f32 %v333, 0.5
    %v385 = vmul.f32 %v335, 0.5
    %v386 = vmul.f32 %v376, 0.5
    %v387 = vmul.f32 %v378, 0.5
    %v388 = vmul.f32 %v337, 0.5
    %v389 = vmul.f32 %v339, 0.5
    %v390 = vmul.f32 %v380, 0.5
    %v391 = vmul.f32 %v382, 0.5
    %v392 = vmul.f32 %v333, 0.70710677
    %v393 = vmul.f32 %v335, 0.70710677
    %v394 = vmul.f32 %v376, 0.70710677
    %v395 = vmul.f32 %v378, 0.70710677
    %v396 = vmul.f32 %v337, 0.70710677
    %v397 = vmul.f32 %v339, 0.70710677
    %v398 = vmul.f32 %v380, 0.70710677
    %v399 = vmul.f32 %v382, 0.70710677
    %v400 = verf.f32.pop %v392
    %v401 = verf.f32.pop %v393
    %v402 = verf.f32.pop %v394
    %v403 = verf.f32.pop %v395
    %v404 = verf.f32.pop %v396
    %v405 = verf.f32.pop %v397
    %v406 = verf.f32.pop %v398
    %v407 = verf.f32.pop %v399
    %v408 = vadd.f32 %v400, 1.0
    %v409 = vadd.f32 %v401, 1.0
    %v410 = vadd.f32 %v402, 1.0
    %v411 = vadd.f32 %v403, 1.0
    %v412 = vadd.f32 %v404, 1.0
    %v413 = vadd.f32 %v405, 1.0
    %v414 = vadd.f32 %v406, 1.0
    %v415 = vadd.f32 %v407, 1.0
    %v416 = vmul.f32 %v384, %v408
    %v417 = vmul.f32 %v385, %v409
    %v418 = vmul.f32 %v386, %v410
    %v419 = vmul.f32 %v387, %v411
    %v420 = vmul.f32 %v388, %v412
    %v421 = vmul.f32 %v389, %v413
    %v422 = vmul.f32 %v390, %v414
    %v423 = vmul.f32 %v391, %v415
    %v424 = vld [vmem:[#allocation10] sm:$0xff]
    %v425 = vld [vmem:[#allocation10 + $0x8] sm:$0xff]
    %v426 = vpack.c.bf16 %v420, %v416
    %v427 = vpack.c.bf16 %v421, %v417
    %v428 = vpack.c.bf16 %v422, %v418
    %v429 = vpack.c.bf16 %v423, %v419
    %v430 = vld [vmem:[#allocation8] sm:$0xf]
    %v431 = vld [vmem:[#allocation8 + $0x4] sm:$0xf]
    %v432 = vld [vmem:[#allocation8 + $0x8] sm:$0xf]
    %v433 = vld [vmem:[#allocation8 + $0xc] sm:$0xf]
    %v434 = vld [vmem:[#allocation8 + $0x10] sm:$0xf]
    %v435 = vld [vmem:[#allocation8 + $0x14] sm:$0xf]
    %v436 = vld [vmem:[#allocation8 + $0x18] sm:$0xf]
    %v437 = vld [vmem:[#allocation8 + $0x1c] sm:$0xf]
    %v438 = vld [vmem:[#allocation8 + $0x20] sm:$0xf]
    %v439 = vld [vmem:[#allocation8 + $0x24] sm:$0xf]
    %v440 = vld [vmem:[#allocation8 + $0x28] sm:$0xf]
    %v441 = vld [vmem:[#allocation8 + $0x2c] sm:$0xf]
    %v442 = vld [vmem:[#allocation8 + $0x30] sm:$0xf]
    %v443 = vld [vmem:[#allocation8 + $0x34] sm:$0xf]
    %v444 = vld [vmem:[#allocation8 + $0x38] sm:$0xf]
    %v445 = vld [vmem:[#allocation8 + $0x3c] sm:$0xf]
    %v446 = vld [vmem:[#allocation8 + $0x40] sm:$0xf]
    %v447 = vld [vmem:[#allocation8 + $0x44] sm:$0xf]
    %v448 = vld [vmem:[#allocation8 + $0x48] sm:$0xf]
    %v449 = vld [vmem:[#allocation8 + $0x4c] sm:$0xf]
    %v450 = vld [vmem:[#allocation8 + $0x50] sm:$0xf]
    %v451 = vld [vmem:[#allocation8 + $0x54] sm:$0xf]
    %v452 = vld [vmem:[#allocation8 + $0x58] sm:$0xf]
    %v453 = vld [vmem:[#allocation8 + $0x5c] sm:$0xf]
    %v454 = vld [vmem:[#allocation8 + $0x60] sm:$0xf]
    %v455 = vld [vmem:[#allocation8 + $0x64] sm:$0xf]
    %v456 = vld [vmem:[#allocation8 + $0x68] sm:$0xf]
    %v457 = vld [vmem:[#allocation8 + $0x6c] sm:$0xf]
    %v458 = vld [vmem:[#allocation8 + $0x70] sm:$0xf]
    %v459 = vld [vmem:[#allocation8 + $0x74] sm:$0xf]
    %v460 = vld [vmem:[#allocation8 + $0x78] sm:$0xf]
    %v461 = vld [vmem:[#allocation8 + $0x7c] sm:$0xf]
    %v462 = vld [vmem:[#allocation8 + $0x80] sm:$0xf]
    %v463 = vld [vmem:[#allocation8 + $0x84] sm:$0xf]
    %v464 = vld [vmem:[#allocation8 + $0x88] sm:$0xf]
    %v465 = vld [vmem:[#allocation8 + $0x8c] sm:$0xf]
    %v466 = vld [vmem:[#allocation8 + $0x90] sm:$0xf]
    %v467 = vld [vmem:[#allocation8 + $0x94] sm:$0xf]
    %v468 = vld [vmem:[#allocation8 + $0x98] sm:$0xf]
    %v469 = vld [vmem:[#allocation8 + $0x9c] sm:$0xf]
    %v470 = vld [vmem:[#allocation8 + $0xa0] sm:$0xf]
    %v471 = vld [vmem:[#allocation8 + $0xa4] sm:$0xf]
    %v472 = vld [vmem:[#allocation8 + $0xa8] sm:$0xf]
    %v473 = vld [vmem:[#allocation8 + $0xac] sm:$0xf]
    %v474 = vld [vmem:[#allocation8 + $0xb0] sm:$0xf]
    %v475 = vld [vmem:[#allocation8 + $0xb4] sm:$0xf]
    %v476 = vld [vmem:[#allocation8 + $0xb8] sm:$0xf]
    %v477 = vld [vmem:[#allocation8 + $0xbc] sm:$0xf]
    %v478 = vld [vmem:[#allocation8 + $0xc0] sm:$0xf]
    %v479 = vld [vmem:[#allocation8 + $0xc4] sm:$0xf]
    %v480 = vld [vmem:[#allocation8 + $0xc8] sm:$0xf]
    %v481 = vld [vmem:[#allocation8 + $0xcc] sm:$0xf]
    %v482 = vld [vmem:[#allocation8 + $0xd0] sm:$0xf]
    %v483 = vld [vmem:[#allocation8 + $0xd4] sm:$0xf]
    %v484 = vld [vmem:[#allocation8 + $0xd8] sm:$0xf]
    %v485 = vld [vmem:[#allocation8 + $0xdc] sm:$0xf]
    %v486 = vld [vmem:[#allocation8 + $0xe0] sm:$0xf]
    %v487 = vld [vmem:[#allocation8 + $0xe4] sm:$0xf]
    %v488 = vld [vmem:[#allocation8 + $0xe8] sm:$0xf]
    %v489 = vld [vmem:[#allocation8 + $0xec] sm:$0xf]
    %v490 = vld [vmem:[#allocation8 + $0xf0] sm:$0xf]
    %v491 = vld [vmem:[#allocation8 + $0xf4] sm:$0xf]
    %v492 = vld [vmem:[#allocation8 + $0xf8] sm:$0xf]
    %v493 = vld [vmem:[#allocation8 + $0xfc] sm:$0xf]
    %v558 = vunpack.c.l.b16 %v430
    %v559 = vunpack.c.l.b16 %v431
    %v560 = vunpack.c.l.b16 %v432
    %v561 = vunpack.c.l.b16 %v433
    %v562 = vunpack.c.l.b16 %v434
    %v563 = vunpack.c.l.b16 %v435
    %v564 = vunpack.c.l.b16 %v436
    %v565 = vunpack.c.l.b16 %v437
    %v566 = vunpack.c.l.b16 %v438
    %v567 = vunpack.c.l.b16 %v439
    %v568 = vunpack.c.l.b16 %v440
    %v569 = vunpack.c.l.b16 %v441
    %v570 = vunpack.c.l.b16 %v442
    %v571 = vunpack.c.l.b16 %v443
    %v572 = vunpack.c.l.b16 %v444
    %v573 = vunpack.c.l.b16 %v445
    %v574 = vunpack.c.l.b16 %v446
    %v575 = vunpack.c.l.b16 %v447
    %v576 = vunpack.c.l.b16 %v448
    %v577 = vunpack.c.l.b16 %v449
    %v578 = vunpack.c.l.b16 %v450
    %v579 = vunpack.c.l.b16 %v451
    %v580 = vunpack.c.l.b16 %v452
    %v581 = vunpack.c.l.b16 %v453
    %v582 = vunpack.c.l.b16 %v454
    %v583 = vunpack.c.l.b16 %v455
    %v584 = vunpack.c.l.b16 %v456
    %v585 = vunpack.c.l.b16 %v457
    %v586 = vunpack.c.l.b16 %v458
    %v587 = vunpack.c.l.b16 %v459
    %v588 = vunpack.c.l.b16 %v460
    %v589 = vunpack.c.l.b16 %v461
    %v590 = vunpack.c.l.b16 %v462
    %v591 = vunpack.c.l.b16 %v463
    %v592 = vunpack.c.l.b16 %v464
    %v593 = vunpack.c.l.b16 %v465
    %v594 = vunpack.c.l.b16 %v466
    %v595 = vunpack.c.l.b16 %v467
    %v596 = vunpack.c.l.b16 %v468
    %v597 = vunpack.c.l.b16 %v469
    %v598 = vunpack.c.l.b16 %v470
    %v599 = vunpack.c.l.b16 %v471
    %v600 = vunpack.c.l.b16 %v472
    %v601 = vunpack.c.l.b16 %v473
    %v602 = vunpack.c.l.b16 %v474
    %v603 = vunpack.c.l.b16 %v475
    %v604 = vunpack.c.l.b16 %v476
    %v605 = vunpack.c.l.b16 %v477
    %v606 = vunpack.c.l.b16 %v478
    %v607 = vunpack.c.l.b16 %v479
    %v608 = vunpack.c.l.b16 %v480
    %v609 = vunpack.c.l.b16 %v481
    %v610 = vunpack.c.l.b16 %v482
    %v611 = vunpack.c.l.b16 %v483
    %v612 = vunpack.c.l.b16 %v484
    %v613 = vunpack.c.l.b16 %v485
    %v614 = vunpack.c.l.b16 %v486
    %v615 = vunpack.c.l.b16 %v487
    %v616 = vunpack.c.l.b16 %v488
    %v617 = vunpack.c.l.b16 %v489
    %v618 = vunpack.c.l.b16 %v490
    %v619 = vunpack.c.l.b16 %v491
    %v620 = vunpack.c.l.b16 %v492
    %v621 = vunpack.c.l.b16 %v493
    %v622 = vpack.c.b16 %v559, %v558
    %v623 = vpack.c.b16 %v561, %v560
    %v624 = vpack.c.b16 %v563, %v562
    %v625 = vpack.c.b16 %v565, %v564
    %v626 = vpack.c.b16 %v567, %v566
    %v627 = vpack.c.b16 %v569, %v568
    %v628 = vpack.c.b16 %v571, %v570
    %v629 = vpack.c.b16 %v573, %v572
    %v630 = vpack.c.b16 %v575, %v574
    %v631 = vpack.c.b16 %v577, %v576
    %v632 = vpack.c.b16 %v579, %v578
    %v633 = vpack.c.b16 %v581, %v580
    %v634 = vpack.c.b16 %v583, %v582
    %v635 = vpack.c.b16 %v585, %v584
    %v636 = vpack.c.b16 %v587, %v586
    %v637 = vpack.c.b16 %v589, %v588
    %v638 = vpack.c.b16 %v591, %v590
    %v639 = vpack.c.b16 %v593, %v592
    %v640 = vpack.c.b16 %v595, %v594
    %v641 = vpack.c.b16 %v597, %v596
    %v642 = vpack.c.b16 %v599, %v598
    %v643 = vpack.c.b16 %v601, %v600
    %v644 = vpack.c.b16 %v603, %v602
    %v645 = vpack.c.b16 %v605, %v604
    %v646 = vpack.c.b16 %v607, %v606
    %v647 = vpack.c.b16 %v609, %v608
    %v648 = vpack.c.b16 %v611, %v610
    %v649 = vpack.c.b16 %v613, %v612
    %v650 = vpack.c.b16 %v615, %v614
    %v651 = vpack.c.b16 %v617, %v616
    %v652 = vpack.c.b16 %v619, %v618
    %v653 = vpack.c.b16 %v621, %v620
    %686 = vmatprep.subr.bf16.mxu0 0
    %687 = vmatpush1.bf16.msra.mxu0 %v629
    %688 = vmatprep.subr.bf16.mxu0 0
    %689 = vmatpush1.bf16.msra.mxu0 %v628
    %690 = vmatprep.subr.bf16.mxu0 0
    %691 = vmatpush1.bf16.msra.mxu0 %v627
    %692 = vmatprep.subr.bf16.mxu0 0
    %693 = vmatpush1.bf16.msra.mxu0 %v626
    %694 = vmatprep.subr.bf16.mxu0 0
    %695 = vmatpush1.bf16.msra.mxu0 %v625
    %696 = vmatprep.subr.bf16.mxu0 0
    %697 = vmatpush1.bf16.msra.mxu0 %v624
    %698 = vmatprep.subr.bf16.mxu0 0
    %699 = vmatpush1.bf16.msra.mxu0 %v623
    %700 = vmatprep.subr.bf16.mxu0 0
    %701 = vmatpush1.bf16.msra.mxu0 %v622
    %702 = vmatprep.subr.bf16.mxu0 0
    %703 = vmatpush2.bf16.msra.mxu0 %v637
    %704 = vmatprep.subr.bf16.mxu0 0
    %705 = vmatpush2.bf16.msra.mxu0 %v636
    %706 = vmatprep.subr.bf16.mxu0 0
    %707 = vmatpush2.bf16.msra.mxu0 %v635
    %708 = vmatprep.subr.bf16.mxu0 0
    %709 = vmatpush2.bf16.msra.mxu0 %v634
    %710 = vmatprep.subr.bf16.mxu0 0
    %711 = vmatpush2.bf16.msra.mxu0 %v633
    %712 = vmatprep.subr.bf16.mxu0 0
    %713 = vmatpush2.bf16.msra.mxu0 %v632
    %714 = vmatprep.subr.bf16.mxu0 0
    %715 = vmatpush2.bf16.msra.mxu0 %v631
    %716 = vmatprep.subr.bf16.mxu0 0
    %717 = vmatpush2.bf16.msra.mxu0 %v630
    %718 = vmatprep.mubr.bf16.mxu0 %v427
    %719 = vmatmul.mubr.bf16.gmra.mxu0 %v426
    %v720 = vpop.f32.mrf.mxu0
    %v721 = vadd.f32 0.0, %v720
    %v722 = vpop.f32.mrf.mxu0
    %v723 = vpop.f32.mrf.mxu0
    %v724 = vadd.f32 0.0, %v723
    %v725 = vpop.f32.mrf.mxu0
    %726 = vdwg.mxu0
    %727 = vmatprep.subr.bf16.mxu0 0
    %728 = vmatpush1.bf16.msra.mxu0 %v645
    %729 = vmatprep.subr.bf16.mxu0 0
    %730 = vmatpush1.bf16.msra.mxu0 %v644
    %731 = vmatprep.subr.bf16.mxu0 0
    %732 = vmatpush1.bf16.msra.mxu0 %v643
    %733 = vmatprep.subr.bf16.mxu0 0
    %734 = vmatpush1.bf16.msra.mxu0 %v642
    %735 = vmatprep.subr.bf16.mxu0 0
    %736 = vmatpush1.bf16.msra.mxu0 %v641
    %737 = vmatprep.subr.bf16.mxu0 0
    %738 = vmatpush1.bf16.msra.mxu0 %v640
    %739 = vmatprep.subr.bf16.mxu0 0
    %740 = vmatpush1.bf16.msra.mxu0 %v639
    %741 = vmatprep.subr.bf16.mxu0 0
    %742 = vmatpush1.bf16.msra.mxu0 %v638
    %743 = vmatprep.subr.bf16.mxu0 0
    %744 = vmatpush2.bf16.msra.mxu0 %v653
    %745 = vmatprep.subr.bf16.mxu0 0
    %746 = vmatpush2.bf16.msra.mxu0 %v652
    %747 = vmatprep.subr.bf16.mxu0 0
    %748 = vmatpush2.bf16.msra.mxu0 %v651
    %749 = vmatprep.subr.bf16.mxu0 0
    %750 = vmatpush2.bf16.msra.mxu0 %v650
    %751 = vmatprep.subr.bf16.mxu0 0
    %752 = vmatpush2.bf16.msra.mxu0 %v649
    %753 = vmatprep.subr.bf16.mxu0 0
    %754 = vmatpush2.bf16.msra.mxu0 %v648
    %755 = vmatprep.subr.bf16.mxu0 0
    %756 = vmatpush2.bf16.msra.mxu0 %v647
    %757 = vmatprep.subr.bf16.mxu0 0
    %758 = vmatpush2.bf16.msra.mxu0 %v646
    %759 = vmatprep.mubr.bf16.mxu0 %v429
    %760 = vmatmul.mubr.bf16.gmra.mxu0 %v428
    %v761 = vpop.f32.mrf.mxu0
    %v762 = vadd.f32 %v721, %v761
    %v763 = vpop.f32.mrf.mxu0
    %v764 = vpop.f32.mrf.mxu0
    %v765 = vadd.f32 %v724, %v764
    %v766 = vpop.f32.mrf.mxu0
    %767 = vdwg.mxu0
    %v768 = vadd.f32 %v424, %v762
    %v769 = vadd.f32 %v425, %v765
    %770 = vst [vmem:[#allocation10] sm:$0xff] %v768
    %771 = vst [vmem:[#allocation10 + $0x8] sm:$0xff] %v769
    // Predicated region
    $region42: #{tpu_custom_call.1} parent=1 // pred_check
      %p772 = pneg %p75
    $region43: #{tpu_custom_call.1} parent=1 // pred_check_branch
      %774 = sbr.rel (%p772) target = $region45
    $region44: #{tpu_custom_call.1} parent=1 // pred_region
      %v775 = vld [vmem:[#allocation10] sm:$0xff]
      %v776 = vld [vmem:[#allocation10 + $0x8] sm:$0xff]
      %v777 = vld [vmem:[%s4] sm:$0x1]
      %v779 = vlaneseq
      %v780 = vshrl.u32 %v779, 7
      %v781 = vsub.s32 0, %v780
      %v782 = vrot.slane %v777, %v781
      %v784 = vadd.f32 %v775, %v782
      %v785 = vadd.f32 %v776, %v782
      %786 = vst [vmem:[#allocation10] sm:$0xff] %v784
      %787 = vst [vmem:[#allocation10 + $0x8] sm:$0xff] %v785
    $region45: #{tpu_custom_call.1} parent=1 // pred_fallthru
      _
    // Predicated region
    $region46: #{tpu_custom_call.1} parent=1 // pred_check
      _
    $region47: #{tpu_custom_call.1} parent=1 // pred_check_branch
      %789 = sbr.rel (0) target = $region49
    $region48: #{tpu_custom_call.1} parent=1 // pred_region
      %s791 = ssub.s32 256, 256
      %792 = vsyncadd [#allocation4], %s791
      %s793 = sshll.u32 [#allocation10], 4
      %s794 = int_to_ptr.vmem [resolvable:$true] %s793
      %799 = dma.vmem_to_hbm [thread:$0]  %s794, 256, %s5, [#allocation4], 128, 128, 8
    $region49: #{tpu_custom_call.1} parent=1 // pred_fallthru
      _
    // Predicated region
    $region50: #{tpu_custom_call.1} parent=1 // pred_check
      _
    $region51: #{tpu_custom_call.1} parent=1 // pred_check_branch
      %801 = sbr.rel (0) target = $region53
    $region52: #{tpu_custom_call.1} parent=1 // pred_region
      %802 = dma.done [#allocation4], 256
    $region53: #{tpu_custom_call.1} parent=1 // pred_fallthru
      _
    %803 = vsyncpa [#allocation3], 1
    %804 = vsyncpa [#allocation6], 1
    %805 = vsyncpa [#allocation9], 1
    %806 = vsyncpa [#allocation4], 1

</llo_original>
